<compile_context>
chip_gen: v7x
topology: tpu7x:2x2x1
jax: 0.10.0
libtpu: 0.0.40
codegen_flags: <defaults>
</compile_context>

<pallas_src>
import functools
import numpy as np
import jax
import jax.numpy as jnp
from jax import lax
from jax.experimental import pallas as pl
from jax.experimental.pallas import tpu as pltpu


# ----------------------------------------------------------------------------
# sincos positional embedding (same math as the PyTorch module, pure numpy)
# ----------------------------------------------------------------------------
def get_1d_sincos_pos_embed_from_grid(embed_dim, pos):
    assert embed_dim % 2 == 0
    omega = np.arange(embed_dim // 2, dtype=np.float64)
    omega /= embed_dim / 2.0
    omega = 1.0 / 10000 ** omega
    pos = pos.reshape(-1)
    out = np.einsum('m,d->md', pos, omega)
    return np.concatenate([np.sin(out), np.cos(out)], axis=1)


def get_2d_sincos_pos_embed_from_grid(embed_dim, grid):
    assert embed_dim % 2 == 0
    emb_h = get_1d_sincos_pos_embed_from_grid(embed_dim // 2, grid[0])
    emb_w = get_1d_sincos_pos_embed_from_grid(embed_dim // 2, grid[1])
    return np.concatenate([emb_h, emb_w], axis=1)


def get_2d_sincos_pos_embed(embed_dim, grid_size, cls_token=False, extra_tokens=0):
    grid_h = np.arange(grid_size, dtype=np.float32)
    grid_w = np.arange(grid_size, dtype=np.float32)
    grid = np.meshgrid(grid_w, grid_h)
    grid = np.stack(grid, axis=0).reshape([2, 1, grid_size, grid_size])
    pos_embed = get_2d_sincos_pos_embed_from_grid(embed_dim, grid)
    if cls_token and extra_tokens > 0:
        pos_embed = np.concatenate(
            [np.zeros([extra_tokens, embed_dim]), pos_embed], axis=0)
    return pos_embed


# ----------------------------------------------------------------------------
# in-kernel helpers (f32 elementwise math — safe on v5e, fine on v6e/v7x)
# ----------------------------------------------------------------------------
def _layernorm(x, gamma, beta, eps=1e-5):
    mean = jnp.mean(x, axis=-1, keepdims=True)
    var = jnp.mean((x - mean) ** 2, axis=-1, keepdims=True)
    return (x - mean) * lax.rsqrt(var + eps) * gamma + beta


def _gelu_exact(x):  # torch nn.GELU() default (erf form)
    return 0.5 * x * (1.0 + lax.erf(x * jnp.float32(0.7071067811865476)))


# ----------------------------------------------------------------------------
# kernel 1: patch embedding, row-tiled over B*N (bf16 input, f32 accumulate)
# ----------------------------------------------------------------------------
def _patch_embed_kernel(p_ref, w_ref, b_ref, o_ref):
    acc = jnp.dot(p_ref[...], w_ref[...], preferred_element_type=jnp.float32)
    o_ref[...] = (acc + b_ref[...]).astype(o_ref.dtype)


def patch_embed(patches, w, b, row_tile=512):
    BN, K = patches.shape
    D = w.shape[1]
    rt = min(row_tile, BN)
    rt = max(8, (rt // 8) * 8)                  # (8,128)-aligned sublane tile
    BNp = -(-BN // rt) * rt
    if BNp != BN:
        patches = jnp.pad(patches, ((0, BNp - BN), (0, 0)))
    patches = patches.astype(jnp.bfloat16)      # halve HBM read bytes
    out = pl.pallas_call(
        _patch_embed_kernel,
        out_shape=jax.ShapeDtypeStruct((BNp, D), jnp.float32),
        grid=(BNp // rt,),
        in_specs=[pl.BlockSpec((rt, K), lambda i: (i, 0)),
                  pl.BlockSpec((K, D), lambda i: (0, 0)),
                  pl.BlockSpec((1, D), lambda i: (0, 0))],
        out_specs=pl.BlockSpec((rt, D), lambda i: (i, 0)),
        compiler_params=pltpu.CompilerParams(
            dimension_semantics=("parallel",),
            vmem_limit_bytes=40 * 1024 * 1024),
    )(patches, w, b)
    return out[:BN]


# ----------------------------------------------------------------------------
# kernel 2: ALL encoder blocks + mlp_head fused.  grid = (layer, batch).
#   - per-layer weights are fetched once per layer (index_map depends only on
#     l; the inner batch axis reuses the resident block)
#   - tokens carried in a (B, T, D) VMEM scratch indexed by the batch id
#   - per-head attention with lazy lane slices; single concat + one full-depth
#     output projection matmul
#   - head computed at the last layer, lane-dense (N, 128) output
# ----------------------------------------------------------------------------
def _blocks_head_kernel(x_ref, vec_ref, b1_ref, wqkv_ref, wproj_ref,
                        w1_ref, w2_ref, hgb_ref, hw_ref, hb_ref,
                        logit_ref, tok_ref, *, num_heads):
    l = pl.program_id(0)
    b = pl.program_id(1)
    T, D = x_ref.shape[1], x_ref.shape[2]
    hd = D // num_heads

    @pl.when(l == 0)
    def _():
        tok_ref[b] = x_ref[b]

    x = tok_ref[b]                                            # (T, D) f32
    vec = vec_ref[0]                                          # (6, D) f32
    n1g, n1b, bproj = vec[0:1], vec[1:2], vec[2:3]
    n2g, n2b, b2 = vec[3:4], vec[4:5], vec[5:6]

    # --- attention on norm1(x); attn scale folded into Q columns of wqkv ---
    x1 = _layernorm(x, n1g, n1b)
    qkv = jnp.dot(x1.astype(jnp.bfloat16), wqkv_ref[0],
                  preferred_element_type=jnp.float32)         # (T, 3D)

    heads = []
    for h in range(num_heads):                                # lazy head slices
        q = qkv[:, h * hd:(h + 1) * hd]
        k = qkv[:, D + h * hd:D + (h + 1) * hd]
        v = qkv[:, 2 * D + h * hd:2 * D + (h + 1) * hd]
        s = jnp.einsum('qd,kd->qk',
                       q.astype(jnp.bfloat16), k.astype(jnp.bfloat16),
                       preferred_element_type=jnp.float32)    # (T, T)
        s = s - jnp.max(s, axis=-1, keepdims=True)
        e = jnp.exp(s)
        p = e * pl.reciprocal(jnp.sum(e, axis=-1, keepdims=True), approx=True)
        heads.append(jnp.dot(p.astype(jnp.bfloat16), v.astype(jnp.bfloat16),
                             preferred_element_type=jnp.float32))   # (T, hd)
    o = jnp.concatenate(heads, axis=-1)                       # (T, D), one concat
    attn = jnp.dot(o.astype(jnp.bfloat16), wproj_ref[0],
                   preferred_element_type=jnp.float32) + bproj      # full-depth proj
    x = x + attn

    # --- MLP on norm2(x) ---
    x2 = _layernorm(x, n2g, n2b)
    h1 = jnp.dot(x2.astype(jnp.bfloat16), w1_ref[0],
                 preferred_element_type=jnp.float32) + b1_ref[0]
    h1 = _gelu_exact(h1)
    h2 = jnp.dot(h1.astype(jnp.bfloat16), w2_ref[0],
                 preferred_element_type=jnp.float32) + b2
    x = x + h2
    tok_ref[b] = x

    # --- fused mlp_head at the last layer (use_cls=False -> drop cls token) ---
    @pl.when(l == pl.num_programs(0) - 1)
    def _():
        xs = x[1:, :]                                         # (N, D)
        xn = _layernorm(xs, hgb_ref[0:1], hgb_ref[1:2])
        y = jnp.dot(xn.astype(jnp.bfloat16), hw_ref[...],
                    preferred_element_type=jnp.float32) + hb_ref[...]
        logit_ref[b] = y.astype(logit_ref.dtype)              # (N, 128) lane-dense


def transformer_blocks_and_head(tokens, blocks_p, head_p, num_heads):
    B, T, D = tokens.shape
    L = blocks_p['wqkv'].shape[0]
    N = T - 1

    def per_layer(arr):  # index depends only on l -> fetched once per layer
        blk = (1,) + arr.shape[1:]
        nd = arr.ndim
        return pl.BlockSpec(blk, lambda l, b, _nd=nd: (l,) + (0,) * (_nd - 1))

    def whole(arr):      # constant index -> fetched once for the whole grid
        nd = arr.ndim
        return pl.BlockSpec(arr.shape, lambda l, b, _nd=nd: (0,) * _nd)

    kern = functools.partial(_blocks_head_kernel, num_heads=num_heads)
    return pl.pallas_call(
        kern,
        out_shape=jax.ShapeDtypeStruct((B, N, 128), jnp.float32),
        grid=(L, B),
        in_specs=[
            whole(tokens),
            per_layer(blocks_p['vec']),
            per_layer(blocks_p['b1']),
            per_layer(blocks_p['wqkv']),
            per_layer(blocks_p['wproj']),
            per_layer(blocks_p['w1']),
            per_layer(blocks_p['w2']),
            whole(head_p['gb']),
            whole(head_p['w_pad']),
            whole(head_p['bias_pad']),
        ],
        # constant output block index: only flushed to HBM once at grid end
        out_specs=pl.BlockSpec((B, N, 128), lambda l, b: (0, 0, 0)),
        scratch_shapes=[pltpu.VMEM((B, T, D), jnp.float32)],
        compiler_params=pltpu.CompilerParams(
            # layer axis is a sequential carry; the inner batch axis stays
            # "arbitrary" too (parallel dims must lead the grid for megacore).
            dimension_semantics=("arbitrary", "arbitrary"),
            vmem_limit_bytes=40 * 1024 * 1024),
    )(tokens, blocks_p['vec'], blocks_p['b1'], blocks_p['wqkv'],
      blocks_p['wproj'], blocks_p['w1'], blocks_p['w2'],
      head_p['gb'], head_p['w_pad'], head_p['bias_pad'])


# ----------------------------------------------------------------------------
# parameter init (deterministic, synthetic — shapes match the PyTorch module)
# ----------------------------------------------------------------------------
def init_params(key, in_channels, patch_size, dim, blocks, num_heads,
                image_size, mlp_ratio=4):
    token_num = (image_size // patch_size) ** 2
    hd = dim // num_heads
    hid = dim * mlp_ratio
    ks = jax.random.split(key, 8)

    def w(k, shape, scale=0.02):
        return scale * jax.random.normal(k, shape, jnp.float32)

    # conv weight (torch layout (dim, C, ps, ps)) -> flattened (C*ps*ps, dim), bf16
    patch_w = w(ks[0], (dim, in_channels, patch_size, patch_size))
    patch_w = patch_w.reshape(dim, -1).T.astype(jnp.bfloat16)

    # stacked per-layer block weights (layer axis first, streamed in-kernel)
    wqkv = w(ks[1], (blocks, dim, 3 * dim))
    wqkv = wqkv.at[:, :, :dim].multiply(jnp.float32(hd ** -0.5))  # fold attn scale
    wproj = w(ks[2], (blocks, dim, dim))                          # (L, D, D)
    w1 = w(ks[3], (blocks, dim, hid))
    w2 = w(ks[4], (blocks, hid, dim))

    ones_d = jnp.ones((blocks, dim), jnp.float32)
    zeros_d = jnp.zeros((blocks, dim), jnp.float32)
    # packed per-layer row params: [norm1.g, norm1.b, proj.b, norm2.g, norm2.b, fc2.b]
    vec = jnp.stack([ones_d, zeros_d, zeros_d, ones_d, zeros_d, zeros_d], axis=1)

    blocks_p = dict(
        vec=vec,                                    # (L, 6, D) f32
        b1=jnp.zeros((blocks, 1, hid), jnp.float32),
        wqkv=wqkv.astype(jnp.bfloat16),             # qkv has no bias (qkv_bias falsy)
        wproj=wproj.astype(jnp.bfloat16),
        w1=w1.astype(jnp.bfloat16),
        w2=w2.astype(jnp.bfloat16),
    )

    # mlp_head: LayerNorm(dim) -> Linear(dim, 1); weight padded to a lane-dense
    # 128-wide column block (real weight in column 0, rest zero).
    # NOTE: module init zeroes the head; use small random values instead so the
    # synthetic output is non-degenerate.
    hw = w(ks[5], (dim,))
    hw_pad = jnp.zeros((dim, 128), jnp.float32).at[:, 0].set(hw)
    head_p = dict(
        gb=jnp.stack([jnp.ones((dim,), jnp.float32),
                      jnp.zeros((dim,), jnp.float32)], axis=0),   # (2, D)
        w_pad=hw_pad.astype(jnp.bfloat16),
        bias_pad=jnp.zeros((1, 128), jnp.float32),
    )

    params = dict(
        patch_w=patch_w,
        patch_b=jnp.zeros((1, dim), jnp.float32),
        cls=w(ks[6], (1, 1, dim), 1.0),
        pos=jnp.asarray(get_2d_sincos_pos_embed(
            dim, int(token_num ** 0.5), cls_token=True, extra_tokens=1),
            jnp.float32),
        blocks=blocks_p,
        head=head_p,
    )
    return params


# ----------------------------------------------------------------------------
# forward
# ----------------------------------------------------------------------------
def classify(x, params, patch_size, dim, num_heads):
    B, C, H, W = x.shape
    Hp, Wp = H // patch_size, W // patch_size
    N = Hp * Wp
    # extract non-overlapping patches (Conv2d stride==kernel, padding=0)
    patches = x.reshape(B, C, Hp, patch_size, Wp, patch_size)
    patches = patches.transpose(0, 2, 4, 1, 3, 5)              # (B, Hp, Wp, C, ps, ps)
    patches = patches.reshape(B * N, C * patch_size * patch_size)

    tok = patch_embed(patches, params['patch_w'], params['patch_b']).reshape(B, N, dim)
    cls = jnp.broadcast_to(params['cls'], (B, 1, dim))
    tokens = jnp.concatenate([cls, tok], axis=1) + params['pos'][:N + 1]
    # emb_dropout(p=0) == identity

    logits_pad = transformer_blocks_and_head(tokens, params['blocks'],
                                             params['head'], num_heads)
    # real logit lives in column 0 of the lane-dense (B, N, 128) output
    return logits_pad[:, :, :1]


def vit_discriminator_forward(x, y, params, patch_size, dim, num_heads):
    out_x = classify(x, params, patch_size, dim, num_heads)
    out_y = classify(y, params, patch_size, dim, num_heads) if y is not None else None
    # TODO(synk): final_sigmoid is defined in __init__ but never applied in forward().
    return out_x, out_y


# ----------------------------------------------------------------------------
if __name__ == "__main__":
    B, C, IMG = 2, 3, 32
    PATCH, DIM, BLOCKS, HEADS = 8, 128, 2, 4     # token_num = (32//8)^2 = 16

    key = jax.random.PRNGKey(0)
    kp, kx = jax.random.split(key)
    params = init_params(kp, C, PATCH, DIM, BLOCKS, HEADS, IMG)
    x = jax.random.normal(kx, (B, C, IMG, IMG), jnp.float32)

    logits, none_out = vit_discriminator_forward(x, None, params, PATCH, DIM, HEADS)
    logits = jax.block_until_ready(logits)

    assert logits.shape == (B, (IMG // PATCH) ** 2, 1)
    assert none_out is None
    assert bool(jnp.all(jnp.isfinite(logits)))
    print("KERNEL_OK")
</pallas_src>

<mosaic_0001>
module attributes {stable_mosaic.version = 11 : i64} {
  func.func @_patch_embed_kernel(%arg0: i32, %arg1: memref<32x192xbf16, #tpu.memory_space<vmem>>, %arg2: memref<192x128xbf16, #tpu.memory_space<vmem>>, %arg3: memref<1x128xf32, #tpu.memory_space<vmem>>, %arg4: memref<32x128xf32, #tpu.memory_space<vmem>>) attributes {dimension_semantics = [#tpu.dimension_semantics<parallel>], iteration_bounds = array<i64: 1>, scalar_prefetch = 0 : i64, scratch_operands = 0 : i64, tpu.core_type = #tpu.core_type<tc>, window_params = [{transform_indices = @transform_0, window_bounds = array<i64: 32, 192>}, {pipeline_mode = #tpu.pipeline_mode<synchronous>, transform_indices = @transform_1, window_bounds = array<i64: 192, 128>}, {pipeline_mode = #tpu.pipeline_mode<synchronous>, transform_indices = @transform_2, window_bounds = array<i64: 1, 128>}, {transform_indices = @transform_3, window_bounds = array<i64: 32, 128>}]} {
    %c0 = arith.constant 0 : index
    %c0_0 = arith.constant 0 : index
    %0 = vector.load %arg1[%c0, %c0_0] : memref<32x192xbf16, #tpu.memory_space<vmem>>, vector<32x192xbf16>
    %c0_1 = arith.constant 0 : index
    %c0_2 = arith.constant 0 : index
    %1 = vector.load %arg2[%c0_1, %c0_2] : memref<192x128xbf16, #tpu.memory_space<vmem>>, vector<192x128xbf16>
    %cst = arith.constant dense<0.000000e+00> : vector<32x128xf32>
    %2 = tpu.matmul %0, %1, %cst {dimension_numbers = #tpu.dot_dimension_numbers<[1], [0], [0], [1], [0, 0, 1, 1], [], []>} : vector<32x192xbf16>, vector<192x128xbf16>, vector<32x128xf32> -> vector<32x128xf32>
    %c0_3 = arith.constant 0 : index
    %c0_4 = arith.constant 0 : index
    %3 = vector.load %arg3[%c0_3, %c0_4] : memref<1x128xf32, #tpu.memory_space<vmem>>, vector<1x128xf32>
    %4 = vector.broadcast %3 : vector<1x128xf32> to vector<32x128xf32>
    %5 = arith.addf %2, %4 : vector<32x128xf32>
    %c0_5 = arith.constant 0 : index
    %c0_6 = arith.constant 0 : index
    %6 = vector.load %arg4[%c0_5, %c0_6] : memref<32x128xf32, #tpu.memory_space<vmem>>, vector<32x128xf32>
    tpu.vector_store %arg4[%c0_5, %c0_6], %5 {strides = array<i32>} : memref<32x128xf32, #tpu.memory_space<vmem>>, vector<32x128xf32>,
    return
  }
  func.func @transform_0(%arg0: i32) -> (i32, i32) {
    %c0_i32 = arith.constant 0 : i32
    %c0_i32_0 = arith.constant 0 : i32
    return %arg0, %c0_i32 : i32, i32
  }
  func.func @transform_1(%arg0: i32) -> (i32, i32) {
    %c0_i32 = arith.constant 0 : i32
    %c0_i32_0 = arith.constant 0 : i32
    %c0_i32_1 = arith.constant 0 : i32
    return %c0_i32, %c0_i32_0 : i32, i32
  }
  func.func @transform_2(%arg0: i32) -> (i32, i32) {
    %c0_i32 = arith.constant 0 : i32
    %c0_i32_0 = arith.constant 0 : i32
    %c0_i32_1 = arith.constant 0 : i32
    return %c0_i32, %c0_i32_0 : i32, i32
  }
  func.func @transform_3(%arg0: i32) -> (i32, i32) {
    %c0_i32 = arith.constant 0 : i32
    %c0_i32_0 = arith.constant 0 : i32
    return %arg0, %c0_i32 : i32, i32
  }
}

</mosaic_0001>

<llo_original>
// kernel: tpu_custom_call.1
$region0: #{tpu_custom_call.1}
  #allocation0 [shape = 'u32[]', space=smem, size = 0x4, offset = 0x4, fixed_abs, tag = 'smem constant byte address 0x4 - core index']
  #allocation1 [shape = 'u32[144,128]{1,0:T(1,128)}', space=vmem, size = 0x12000, scoped, tag = 'internal scratch']
  %s0 = inlined_call_operand.hbm [shape: bf16[32,192], index: 0, kind: input, shape index: {}]
  %s1 = inlined_call_operand.hbm [shape: bf16[192,128], index: 1, kind: input, shape index: {}]
  %s2 = inlined_call_operand.vmem [shape: f32[1,128], index: 2, kind: input, shape index: {}]
  %s3 = inlined_call_operand.hbm [shape: f32[32,128], index: 3, kind: output, shape index: {}]
  %s4 = sld [smem:[#allocation0]]
  $region30: #{tpu_custom_call.1} parent=0
    _
  %s6 = ssub.s32 1, %s4
  %s7 = scalar_select 0, %s6, %s4
  $region1: #{tpu_custom_call.1} parent=0
    #allocation2 [shape = 'u8[16384]{0}', space=vmem, size = 0x4000, scoped, tag = 'input window, operand 0, single buffered']
    #allocation3 [shape = 's32[1]{0}', space=sflag, size = 0x4, scoped, tag = 'scoped memory for tpu_custom_call.1']
    #allocation4 [shape = 's32[1]{0}', space=sflag, size = 0x4, scoped, tag = 'scoped memory for tpu_custom_call.1']
    #allocation5 [shape = 'u8[49152]{0}', space=vmem, size = 0xc000, scoped, tag = 'input window, operand 1, single buffered']
    #allocation6 [shape = 's32[1]{0}', space=sflag, size = 0x4, scoped, tag = 'scoped memory for tpu_custom_call.1']
    #allocation7 [shape = 'u8[16384]{0}', space=vmem, size = 0x4000, scoped, tag = 'output window, operand 0, single buffered']
    %8 = vsyncpa [#allocation3], 0
    %9 = vsyncpa [#allocation6], 0
    %10 = vsyncpa [#allocation4], 0
    // Predicated region
    $region2: #{tpu_custom_call.1} parent=1 // pred_check
      _
    $region3: #{tpu_custom_call.1} parent=1 // pred_check_branch
      %12 = sbr.rel (0) target = $region5
    $region4: #{tpu_custom_call.1} parent=1 // pred_region
      %s14 = ssub.s32 512, 512
      %15 = vsyncadd [#allocation3], %s14
      %s16 = sshll.u32 [#allocation2], 4
      %s17 = int_to_ptr.vmem [resolvable:$true] %s16
      %22 = dma.hbm_to_vmem [thread:$0]  %s0, 512, %s17, [#allocation3], 128, 128, 8
    $region5: #{tpu_custom_call.1} parent=1 // pred_fallthru
      _
    // Predicated region
    $region6: #{tpu_custom_call.1} parent=1 // pred_check
      _
    $region7: #{tpu_custom_call.1} parent=1 // pred_check_branch
      %24 = sbr.rel (0) target = $region9
    $region8: #{tpu_custom_call.1} parent=1 // pred_region
      %s26 = ssub.s32 1536, 1536
      %27 = vsyncadd [#allocation6], %s26
      %s28 = sshll.u32 [#allocation5], 4
      %s29 = int_to_ptr.vmem [resolvable:$true] %s28
      %34 = dma.hbm_to_vmem [thread:$0]  %s1, 1536, %s29, [#allocation6], 64, 64, 4
    $region9: #{tpu_custom_call.1} parent=1 // pred_fallthru
      _
    // Predicated region
    $region10: #{tpu_custom_call.1} parent=1 // pred_check
      _
    $region11: #{tpu_custom_call.1} parent=1 // pred_check_branch
      %36 = sbr.rel (0) target = $region13
    $region12: #{tpu_custom_call.1} parent=1 // pred_region
      _
    $region13: #{tpu_custom_call.1} parent=1 // pred_fallthru
      _
    // Predicated region
    $region14: #{tpu_custom_call.1} parent=1 // pred_check
      _
    $region15: #{tpu_custom_call.1} parent=1 // pred_check_branch
      %38 = sbr.rel (0) target = $region17
    $region16: #{tpu_custom_call.1} parent=1 // pred_region
      %39 = dma.done [#allocation3], 512
    $region17: #{tpu_custom_call.1} parent=1 // pred_fallthru
      _
    // Predicated region
    $region18: #{tpu_custom_call.1} parent=1 // pred_check
      _
    $region19: #{tpu_custom_call.1} parent=1 // pred_check_branch
      %41 = sbr.rel (0) target = $region21
    $region20: #{tpu_custom_call.1} parent=1 // pred_region
      %42 = dma.done [#allocation6], 1536
    $region21: #{tpu_custom_call.1} parent=1 // pred_fallthru
      _
    %v44 = vld [vmem:[#allocation2] sm:$0xff]
    %v45 = vld [vmem:[#allocation2 + $0x8] sm:$0xff]
    %v46 = vld [vmem:[#allocation2 + $0x10] sm:$0xff]
    %v47 = vld [vmem:[#allocation2 + $0x18] sm:$0xff]
    %v48 = vld [vmem:[#allocation5] sm:$0xf]
    %v49 = vld [vmem:[#allocation5 + $0x4] sm:$0xf]
    %v50 = vld [vmem:[#allocation5 + $0x8] sm:$0xf]
    %v51 = vld [vmem:[#allocation5 + $0xc] sm:$0xf]
    %v52 = vld [vmem:[#allocation5 + $0x10] sm:$0xf]
    %v53 = vld [vmem:[#allocation5 + $0x14] sm:$0xf]
    %v54 = vld [vmem:[#allocation5 + $0x18] sm:$0xf]
    %v55 = vld [vmem:[#allocation5 + $0x1c] sm:$0xf]
    %v56 = vld [vmem:[#allocation5 + $0x20] sm:$0xf]
    %v57 = vld [vmem:[#allocation5 + $0x24] sm:$0xf]
    %v58 = vld [vmem:[#allocation5 + $0x28] sm:$0xf]
    %v59 = vld [vmem:[#allocation5 + $0x2c] sm:$0xf]
    %v60 = vld [vmem:[#allocation5 + $0x30] sm:$0xf]
    %v61 = vld [vmem:[#allocation5 + $0x34] sm:$0xf]
    %v62 = vld [vmem:[#allocation5 + $0x38] sm:$0xf]
    %v63 = vld [vmem:[#allocation5 + $0x3c] sm:$0xf]
    %v64 = vld [vmem:[#allocation5 + $0x40] sm:$0xf]
    %v65 = vld [vmem:[#allocation5 + $0x44] sm:$0xf]
    %v66 = vld [vmem:[#allocation5 + $0x48] sm:$0xf]
    %v67 = vld [vmem:[#allocation5 + $0x4c] sm:$0xf]
    %v68 = vld [vmem:[#allocation5 + $0x50] sm:$0xf]
    %v69 = vld [vmem:[#allocation5 + $0x54] sm:$0xf]
    %v70 = vld [vmem:[#allocation5 + $0x58] sm:$0xf]
    %v71 = vld [vmem:[#allocation5 + $0x5c] sm:$0xf]
    %v72 = vld [vmem:[%s2] sm:$0x1]
    %v74 = vlaneseq
    %v75 = vshrl.u32 %v74, 7
    %v76 = vsub.s32 0, %v75
    %v77 = vrot.slane %v72, %v76
    %v83 = vunpack.c.l.b16 %v44
    %v84 = vunpack.c.h.b16 %v44
    %v85 = vunpack.c.l.b16 %v45
    %v86 = vunpack.c.h.b16 %v45
    %v87 = vunpack.c.l.b16 %v46
    %v88 = vunpack.c.h.b16 %v46
    %v89 = vunpack.c.l.b16 %v47
    %v90 = vunpack.c.h.b16 %v47
    %v91 = vpack.c.b16 %v85, %v83
    %v92 = vpack.c.b16 %v86, %v84
    %v93 = vpack.c.b16 %v89, %v87
    %v94 = vpack.c.b16 %v90, %v88
    %v121 = vunpack.c.l.b16 %v48
    %v122 = vunpack.c.l.b16 %v49
    %v123 = vunpack.c.l.b16 %v50
    %v124 = vunpack.c.l.b16 %v51
    %v125 = vunpack.c.l.b16 %v52
    %v126 = vunpack.c.l.b16 %v53
    %v127 = vunpack.c.l.b16 %v54
    %v128 = vunpack.c.l.b16 %v55
    %v129 = vunpack.c.l.b16 %v56
    %v130 = vunpack.c.l.b16 %v57
    %v131 = vunpack.c.l.b16 %v58
    %v132 = vunpack.c.l.b16 %v59
    %v133 = vunpack.c.l.b16 %v60
    %v134 = vunpack.c.l.b16 %v61
    %v135 = vunpack.c.l.b16 %v62
    %v136 = vunpack.c.l.b16 %v63
    %v137 = vunpack.c.l.b16 %v64
    %v138 = vunpack.c.l.b16 %v65
    %v139 = vunpack.c.l.b16 %v66
    %v140 = vunpack.c.l.b16 %v67
    %v141 = vunpack.c.l.b16 %v68
    %v142 = vunpack.c.l.b16 %v69
    %v143 = vunpack.c.l.b16 %v70
    %v144 = vunpack.c.l.b16 %v71
    %v145 = vpack.c.b16 %v122, %v121
    %v146 = vpack.c.b16 %v124, %v123
    %v147 = vpack.c.b16 %v126, %v125
    %v148 = vpack.c.b16 %v128, %v127
    %v149 = vpack.c.b16 %v130, %v129
    %v150 = vpack.c.b16 %v132, %v131
    %v151 = vpack.c.b16 %v134, %v133
    %v152 = vpack.c.b16 %v136, %v135
    %v153 = vpack.c.b16 %v138, %v137
    %v154 = vpack.c.b16 %v140, %v139
    %v155 = vpack.c.b16 %v142, %v141
    %v156 = vpack.c.b16 %v144, %v143
    %vm169 = vcmask 523264
    %v171 = vsel %vm169, %v92, 0
    %v174 = vsel %vm169, %v94, 0
    %176 = vmatprep.subr.bf16.mxu0 0
    %177 = vmatpush1.bf16.msra.mxu0 %v145
    %178 = vmatprep.subr.bf16.mxu0 0
    %179 = vmatpush1.bf16.msra.mxu0 %v146
    %180 = vmatprep.subr.bf16.mxu0 0
    %181 = vmatpush1.bf16.msra.mxu0 %v147
    %182 = vmatprep.subr.bf16.mxu0 0
    %183 = vmatpush1.bf16.msra.mxu0 %v148
    %184 = vmatprep.subr.bf16.mxu0 0
    %185 = vmatpush1.bf16.msra.mxu0 %v149
    %186 = vmatprep.subr.bf16.mxu0 0
    %187 = vmatpush1.bf16.msra.mxu0 %v150
    %188 = vmatprep.subr.bf16.mxu0 0
    %189 = vmatpush1.bf16.msra.mxu0 %v151
    %190 = vmatprep.subr.bf16.mxu0 0
    %191 = vmatpush1.bf16.msra.mxu0 %v152
    %192 = vmatprep.subr.bf16.mxu0 0
    %193 = vmatpush1.bf16.msra.mxu0 %v153
    %194 = vmatprep.subr.bf16.mxu0 0
    %195 = vmatpush1.bf16.msra.mxu0 %v154
    %196 = vmatprep.subr.bf16.mxu0 0
    %197 = vmatpush1.bf16.msra.mxu0 %v155
    %198 = vmatprep.subr.bf16.mxu0 0
    %199 = vmatpush1.bf16.msra.mxu0 %v156
    %200 = vmatprep.subr.bf16.mxu0 0
    %201 = vmatpush1.bf16.msra.mxu0 0
    %202 = vmatprep.subr.bf16.mxu0 0
    %203 = vmatpush1.bf16.msra.mxu0 0
    %204 = vmatprep.subr.bf16.mxu0 0
    %205 = vmatpush1.bf16.msra.mxu0 0
    %206 = vmatprep.subr.bf16.mxu0 0
    %207 = vmatpush1.bf16.msra.mxu0 0
    %208 = vmatprep.mubr.bf16.mxu0 %v171
    %209 = vmatmul.mubr.bf16.gmra.mrb[0].mxu0 %v91
    %v210 = vpop.f32.mrb[0].mxu0
    %v211 = vadd.f32 %v77, %v210
    %v212 = vpop.f32.mrb[0].mxu0
    %v213 = vpop.f32.mrb[0].mxu0
    %v214 = vadd.f32 %v77, %v213
    %v215 = vpop.f32.mrb[0].mxu0
    %216 = vmatprep.mubr.bf16.mxu0 %v174
    %217 = vmatmul.mubr.bf16.gmra.mrb[0].mxu0 %v93
    %v218 = vpop.f32.mrb[0].mxu0
    %v219 = vadd.f32 %v77, %v218
    %v220 = vpop.f32.mrb[0].mxu0
    %v221 = vpop.f32.mrb[0].mxu0
    %v222 = vadd.f32 %v77, %v221
    %v223 = vpop.f32.mrb[0].mxu0
    %224 = vdwg.mxu0
    %225 = vst [vmem:[#allocation7] sm:$0xff] %v211
    %226 = vst [vmem:[#allocation7 + $0x8] sm:$0xff] %v214
    %227 = vst [vmem:[#allocation7 + $0x10] sm:$0xff] %v219
    %228 = vst [vmem:[#allocation7 + $0x18] sm:$0xff] %v222
    // Predicated region
    $region22: #{tpu_custom_call.1} parent=1 // pred_check
      _
    $region23: #{tpu_custom_call.1} parent=1 // pred_check_branch
      %230 = sbr.rel (0) target = $region25
    $region24: #{tpu_custom_call.1} parent=1 // pred_region
      %s232 = ssub.s32 512, 512
      %233 = vsyncadd [#allocation4], %s232
      %s234 = sshll.u32 [#allocation7], 4
      %s235 = int_to_ptr.vmem [resolvable:$true] %s234
      %240 = dma.vmem_to_hbm [thread:$0]  %s235, 512, %s3, [#allocation4], 128, 128, 8
    $region25: #{tpu_custom_call.1} parent=1 // pred_fallthru
      _
    // Predicated region
    $region26: #{tpu_custom_call.1} parent=1 // pred_check
      _
    $region27: #{tpu_custom_call.1} parent=1 // pred_check_branch
      %242 = sbr.rel (0) target = $region29
    $region28: #{tpu_custom_call.1} parent=1 // pred_region
      %243 = dma.done [#allocation4], 512
    $region29: #{tpu_custom_call.1} parent=1 // pred_fallthru
      _
    %244 = vsyncpa [#allocation3], 1
    %245 = vsyncpa [#allocation6], 1
    %246 = vsyncpa [#allocation4], 1

</llo_original>
